<compile_context>
chip_gen: v5e
topology: v5e:2x2
jax: 0.10.0
libtpu: 0.0.40
codegen_flags: <defaults>
</compile_context>

<pallas_src>
import jax
import jax.numpy as jnp
from jax.experimental import pallas as pl
from jax.experimental.pallas import tpu as pltpu


def _round_up(x, m):
    return ((x + m - 1) // m) * m


def _tpu_vmem_capacity_bytes():
    """Physical VMEM per TensorCore; used to pick per-generation tile budgets."""
    try:
        info = pltpu.get_tpu_info()
        cap = getattr(info, "vmem_capacity_bytes", None)
        if cap:
            return int(cap)
    except Exception:
        pass
    return 64 << 20  # conservative default (v7x-class per-core VMEM)


def _budgets():
    cap = _tpu_vmem_capacity_bytes()
    if cap <= (64 << 20):
        # v7x-class: 64 MiB VMEM, ~3.2 TB/s HBM -> ~6 MiB/input buffer, 44 MiB limit.
        return 6 << 20, 44 << 20
    # v5e / v6e: 128 MiB VMEM -> ~8 MiB/input buffer, 64 MiB scoped limit.
    return 8 << 20, 64 << 20


def _pick_block_rows(n_rows, d, dtype, *, per_buffer_target, vmem_limit):
    """Rows per tile, derived from the *actual* VMEM footprint (128-lane
    padding, mask buffer, double buffering).  Multiple of 8, no row cap."""
    itemsize = jnp.dtype(dtype).itemsize
    d_pad = _round_up(max(d, 1), 128)      # last dim pads to 128 lanes in VMEM
    xy_row_bytes = d_pad * itemsize        # one row of x (or y) in VMEM
    mask_row_bytes = 128 * 4               # (br, 1) f32 mask pads to 128 lanes

    rows = max(8, per_buffer_target // xy_row_bytes)

    def footprint(r):
        # 2 inputs + mask, each double-buffered by the pipeline, + output blocks.
        return 2 * (2 * r * xy_row_bytes) + 2 * r * mask_row_bytes + 2 * 8 * 128 * 4

    budget = vmem_limit - (4 << 20)        # headroom for compiler scratch
    while rows > 8 and footprint(rows) > budget:
        rows //= 2
    rows = max(8, (rows // 8) * 8)

    if n_rows <= rows:
        rows = _round_up(max(n_rows, 1), 8)
    # Keep >= 2 grid steps whenever there is enough work so v7x's two
    # TensorCores both contribute (one harmless extra step on v5e/v6e).
    if n_rows > 8 and pl.cdiv(n_rows, rows) < 2:
        rows = max(8, _round_up(pl.cdiv(n_rows, 2), 8))
    return rows


def _make_kernel(n_rows, block_rows, ragged):
    def kernel(x_ref, y_ref, m_ref, out_ref):
        # x_ref, y_ref: (block_rows, D); m_ref: (block_rows, 1); out_ref: (1, 8, 128)
        # Subtract in f32 (no-op for f32 inputs; more accurate for bf16).
        d = jnp.abs(x_ref[...].astype(jnp.float32) - y_ref[...].astype(jnp.float32))
        contrib = d * m_ref[...]
        if ragged:
            # Gate rows past R in the last tile: their contents are unspecified
            # (possibly NaN/Inf) and must not poison the sum.  In-bounds rows
            # keep plain multiply-by-mask (preserves PyTorch NaN propagation).
            base = pl.program_id(0) * block_rows
            row_ids = base + jax.lax.broadcasted_iota(
                jnp.int32, (block_rows, 1), 0)
            contrib = jnp.where(row_ids < n_rows, contrib, 0.0)
        partial = jnp.sum(contrib)
        # Broadcast the scalar partial over a lane-dense output block; the
        # wrapper reads element [i, 0, 0] of each block.
        out_ref[...] = jnp.full(out_ref.shape, partial, dtype=jnp.float32)

    return kernel


def l1_loss_masked(inputs, target, length):
    """inputs, target: (B, T, D) float; length: (B,) int. Returns scalar f32."""
    B, T, D = inputs.shape
    length = length.astype(jnp.int32)
    R = B * T

    x = inputs.reshape(R, D)
    y = target.reshape(R, D)
    # Per-row mask column: row b*T + t is valid iff t < length[b].
    mask = jnp.arange(T, dtype=jnp.int32)[None, :] < length[:, None]
    mask = mask.astype(jnp.float32).reshape(R, 1)

    per_buffer_target, vmem_limit = _budgets()
    br = _pick_block_rows(R, D, inputs.dtype,
                          per_buffer_target=per_buffer_target,
                          vmem_limit=vmem_limit)
    grid = pl.cdiv(R, br)
    ragged = (grid * br != R)

    itemsize = jnp.dtype(inputs.dtype).itemsize
    cost = pl.CostEstimate(
        flops=4 * R * D,
        transcendentals=0,
        bytes_accessed=2 * R * D * itemsize + R * 4 + grid * 8 * 128 * 4,
    )

    partials = pl.pallas_call(
        _make_kernel(R, br, ragged),
        out_shape=jax.ShapeDtypeStruct((grid, 8, 128), jnp.float32),
        grid_spec=pltpu.PrefetchScalarGridSpec(
            num_scalar_prefetch=0,
            grid=(grid,),
            in_specs=[
                pl.BlockSpec((br, D), lambda i: (i, 0)),
                pl.BlockSpec((br, D), lambda i: (i, 0)),
                pl.BlockSpec((br, 1), lambda i: (i, 0)),
            ],
            out_specs=pl.BlockSpec((1, 8, 128), lambda i: (i, 0, 0)),
        ),
        compiler_params=pltpu.CompilerParams(
            dimension_semantics=("parallel",),
            vmem_limit_bytes=vmem_limit,
        ),
        cost_estimate=cost,
    )(x, y, mask)

    num = jnp.sum(partials[:, 0, 0])
    den = jnp.sum(length).astype(jnp.float32) * jnp.float32(D)
    # TODO(synk): like the PyTorch module, no guard against sum(length) == 0.
    return (num / den).astype(jnp.float32)


def _reference(inputs, target, length):
    B, T, D = inputs.shape
    mask = (jnp.arange(T)[None, :] < length[:, None]).astype(jnp.float32)
    mask = jnp.broadcast_to(mask[:, :, None], (B, T, D))
    loss = jnp.sum(jnp.abs(inputs * mask - target * mask))
    return loss / jnp.sum(mask)


if __name__ == "__main__":
    key = jax.random.PRNGKey(0)
    k1, k2, k3, k4 = jax.random.split(key, 4)

    # Test 1: small, evenly-tiled case (matches the module's (B, T, D) layout).
    B, T, D = 2, 8, 32
    inputs = jax.random.normal(k1, (B, T, D), dtype=jnp.float32)
    target = jax.random.normal(k2, (B, T, D), dtype=jnp.float32)
    length = jnp.array([8, 5], dtype=jnp.int32)

    loss = jax.block_until_ready(l1_loss_masked(inputs, target, length))
    ref = jax.block_until_ready(_reference(inputs, target, length))
    assert jnp.allclose(loss, ref, rtol=1e-5, atol=1e-5), (loss, ref)

    # Test 2: ragged last tile (R=39 not a multiple of the block) and D not a
    # multiple of 128 -> exercises the in-kernel row-validity gating.
    B2, T2, D2 = 3, 13, 40
    inputs2 = jax.random.normal(k3, (B2, T2, D2), dtype=jnp.float32)
    target2 = jax.random.normal(k4, (B2, T2, D2), dtype=jnp.float32)
    length2 = jnp.array([13, 7, 2], dtype=jnp.int32)

    loss2 = jax.block_until_ready(l1_loss_masked(inputs2, target2, length2))
    ref2 = jax.block_until_ready(_reference(inputs2, target2, length2))
    assert jnp.allclose(loss2, ref2, rtol=1e-5, atol=1e-5), (loss2, ref2)

    print("KERNEL_OK")
</pallas_src>

<mosaic_0001>
module attributes {stable_mosaic.version = 11 : i64} {
  func.func @kernel(%arg0: i32, %arg1: memref<8x32xf32, #tpu.memory_space<vmem>>, %arg2: memref<8x32xf32, #tpu.memory_space<vmem>>, %arg3: memref<8x1xf32, #tpu.memory_space<vmem>>, %arg4: memref<1x8x128xf32, #tpu.memory_space<vmem>>) attributes {dimension_semantics = [#tpu.dimension_semantics<parallel>], iteration_bounds = array<i64: 2>, scalar_prefetch = 0 : i64, scratch_operands = 0 : i64, tpu.core_type = #tpu.core_type<tc>, window_params = [{transform_indices = @transform_0, window_bounds = array<i64: 8, 32>}, {transform_indices = @transform_1, window_bounds = array<i64: 8, 32>}, {transform_indices = @transform_2, window_bounds = array<i64: 8, 1>}, {transform_indices = @transform_3, window_bounds = array<i64: 1, 8, 128>}]} {
    %c0 = arith.constant 0 : index
    %c0_0 = arith.constant 0 : index
    %0 = vector.load %arg1[%c0, %c0_0] : memref<8x32xf32, #tpu.memory_space<vmem>>, vector<8x32xf32>
    %c0_1 = arith.constant 0 : index
    %c0_2 = arith.constant 0 : index
    %1 = vector.load %arg2[%c0_1, %c0_2] : memref<8x32xf32, #tpu.memory_space<vmem>>, vector<8x32xf32>
    %2 = arith.subf %0, %1 : vector<8x32xf32>
    %3 = math.absf %2 : vector<8x32xf32>
    %c0_3 = arith.constant 0 : index
    %c0_4 = arith.constant 0 : index
    %4 = vector.load %arg3[%c0_3, %c0_4] : memref<8x1xf32, #tpu.memory_space<vmem>>, vector<8x1xf32>
    %5 = vector.broadcast %4 : vector<8x1xf32> to vector<8x32xf32>
    %6 = arith.mulf %3, %5 : vector<8x32xf32>
    %7 = vector.shape_cast %6 : vector<8x32xf32> to vector<1x8x32xf32>
    %cst = arith.constant dense<0.000000e+00> : vector<1xf32>
    %8 = vector.multi_reduction <add>, %7, %cst [1, 2] : vector<1x8x32xf32> to vector<1xf32>
    %9 = vector.shape_cast %8 : vector<1xf32> to vector<1x1x1xf32>
    %10 = vector.extract %9[0, 0, 0] : f32 from vector<1x1x1xf32>
    %11 = vector.broadcast %10 : f32 to vector<1x8x128xf32>
    %c0_5 = arith.constant 0 : index
    %c0_6 = arith.constant 0 : index
    %c0_7 = arith.constant 0 : index
    %12 = vector.load %arg4[%c0_5, %c0_6, %c0_7] : memref<1x8x128xf32, #tpu.memory_space<vmem>>, vector<1x8x128xf32>
    tpu.vector_store %arg4[%c0_5, %c0_6, %c0_7], %11 {strides = array<i32>} : memref<1x8x128xf32, #tpu.memory_space<vmem>>, vector<1x8x128xf32>,
    return
  }
  func.func @transform_0(%arg0: i32) -> (i32, i32) {
    %c0_i32 = arith.constant 0 : i32
    %c0_i32_0 = arith.constant 0 : i32
    return %arg0, %c0_i32 : i32, i32
  }
  func.func @transform_1(%arg0: i32) -> (i32, i32) {
    %c0_i32 = arith.constant 0 : i32
    %c0_i32_0 = arith.constant 0 : i32
    return %arg0, %c0_i32 : i32, i32
  }
  func.func @transform_2(%arg0: i32) -> (i32, i32) {
    %c0_i32 = arith.constant 0 : i32
    %c0_i32_0 = arith.constant 0 : i32
    return %arg0, %c0_i32 : i32, i32
  }
  func.func @transform_3(%arg0: i32) -> (i32, i32, i32) {
    %c0_i32 = arith.constant 0 : i32
    %c0_i32_0 = arith.constant 0 : i32
    %c0_i32_1 = arith.constant 0 : i32
    return %arg0, %c0_i32, %c0_i32_0 : i32, i32, i32
  }
}

</mosaic_0001>

<llo_original>
// kernel: tpu_custom_call.1
$region0: #{tpu_custom_call.1}
  #allocation0 [shape = 'u32[]', space=smem, size = 0x4, offset = 0x4, fixed_abs, tag = 'smem constant byte address 0x4 - core index']
  #allocation1 [shape = 'u32[72,128]{1,0:T(1,128)}', space=vmem, size = 0x9000, scoped, tag = 'internal scratch']
  %s0 = inlined_call_operand.vmem [shape: f32[16,32], index: 0, kind: input, shape index: {}]
  %s1 = inlined_call_operand.hbm [shape: f32[16,32], index: 1, kind: input, shape index: {}]
  %s2 = inlined_call_operand.vmem [shape: f32[16,1], index: 2, kind: input, shape index: {}]
  %s3 = inlined_call_operand.hbm [shape: f32[2,8,128], index: 3, kind: output, shape index: {}]
  %s4 = sld [smem:[#allocation0]]
  $region49: #{tpu_custom_call.1} parent=0
    _
  %s6 = ssub.s32 1, %s4
  %s7 = scalar_select 0, %s6, %s4
  $region1: #{tpu_custom_call.1} parent=0
    #allocation2 [shape = 'u8[8192]{0}', space=vmem, size = 0x2000, scoped, tag = 'input window, operand 1']
    #allocation3 [shape = 's32[2]{0}', space=sflag, size = 0x8, scoped, tag = 'scoped memory for tpu_custom_call.1']
    #allocation4 [shape = 's32[2]{0}', space=sflag, size = 0x8, scoped, tag = 'scoped memory for tpu_custom_call.1']
    #allocation5 [shape = 'u8[8192]{0}', space=vmem, size = 0x2000, scoped, tag = 'output window, operand 0']
    %8 = vsyncpa [#allocation3], 0
    %s9 = scalar_lea.sflag [#allocation3], 1
    %10 = vsyncpa %s9, 0
    %11 = vsyncpa [#allocation4], 0
    %s12 = scalar_lea.sflag [#allocation4], 1
    %13 = vsyncpa %s12, 0
    loop: start=0, step=1, limit=4
    $region2: #{tpu_custom_call.1} parent=1 // loop_pre_header
      _
    $region3: #{tpu_custom_call.1} parent=1 // loop_header
      %s15 = sphi 0, %s19
      %p16 = scmp.ge.s32.totalorder %s15, 4
      %s25 = sphi 0, %s27
      %s28 = sphi 0, %s25
      %s29 = sphi 0, %s28
      %s45 = sphi 0, %s29
      %s51 = sphi 0, %s53
      %s54 = sphi 0, %s51
      %s55 = sphi 0, %s54
      %s71 = sphi 0, %s55
      %s77 = sphi 0, %s79
      %s80 = sphi 0, %s77
      %s81 = sphi 0, %s80
      %s97 = sphi 0, %s81
      %s103 = sphi 0, %s105
      %s106 = sphi 0, %s103
      %s107 = sphi 0, %s106
      %s123 = sphi 0, %s107
    $region4: #{tpu_custom_call.1} parent=1 // loop_header_branch
      %18 = sbr.rel (%p16) target = $region8
    $region5: #{tpu_custom_call.1} parent=1 // loop_body
      %s20 = ssub.s32 %s15, 1
      %s21 = ssub.s32 %s15, 2
      %s22 = sadd.s32 %s15, 1
      %s23 = ssub.s32 %s15, %s22
      %p24 = scmp.eq.s32.totalorder %s23, 0
      %s26 = sadd.s32 %s25, 1
      %s27 = scalar_select %p24, %s25, %s26
      %p30 = pneg %p24
      %p31 = scmp.eq.s32.totalorder %s15, 1
      %p32 = por %p30, %p31
      %p33 = scmp.ne.s32.totalorder %s25, %s28
      %p34 = scmp.eq.s32.totalorder %s15, 0
      %p35 = por %p33, %p34
      %p36 = scmp.ne.s32.totalorder %s25, %s28
      %p37 = scmp.eq.s32.totalorder %s20, 1
      %p38 = por %p36, %p37
      %p39 = scmp.ne.s32.totalorder %s28, %s29
      %p40 = scmp.eq.s32.totalorder %s20, 0
      %p41 = por %p39, %p40
      %p42 = scmp.ne.s32.totalorder %s28, %s29
      %p43 = scmp.eq.s32.totalorder %s21, 1
      %p44 = por %p42, %p43
      %p46 = scmp.ne.s32.totalorder %s29, %s45
      %p47 = scmp.eq.s32.totalorder %s21, 0
      %p48 = por %p46, %p47
      %s49 = ssub.s32 %s15, %s22
      %p50 = scmp.eq.s32.totalorder %s49, 0
      %s52 = sadd.s32 %s51, 1
      %s53 = scalar_select %p50, %s51, %s52
      %p56 = pneg %p50
      %p57 = scmp.eq.s32.totalorder %s15, 1
      %p58 = por %p56, %p57
      %p59 = scmp.ne.s32.totalorder %s51, %s54
      %p60 = scmp.eq.s32.totalorder %s15, 0
      %p61 = por %p59, %p60
      %p62 = scmp.ne.s32.totalorder %s51, %s54
      %p63 = scmp.eq.s32.totalorder %s20, 1
      %p64 = por %p62, %p63
      %p65 = scmp.ne.s32.totalorder %s54, %s55
      %p66 = scmp.eq.s32.totalorder %s20, 0
      %p67 = por %p65, %p66
      %p68 = scmp.ne.s32.totalorder %s54, %s55
      %p69 = scmp.eq.s32.totalorder %s21, 1
      %p70 = por %p68, %p69
      %p72 = scmp.ne.s32.totalorder %s55, %s71
      %p73 = scmp.eq.s32.totalorder %s21, 0
      %p74 = por %p72, %p73
      %s75 = ssub.s32 %s15, %s22
      %p76 = scmp.eq.s32.totalorder %s75, 0
      %s78 = sadd.s32 %s77, 1
      %s79 = scalar_select %p76, %s77, %s78
      %p82 = pneg %p76
      %p83 = scmp.eq.s32.totalorder %s15, 1
      %p84 = por %p82, %p83
      %p85 = scmp.ne.s32.totalorder %s77, %s80
      %p86 = scmp.eq.s32.totalorder %s15, 0
      %p87 = por %p85, %p86
      %p88 = scmp.ne.s32.totalorder %s77, %s80
      %p89 = scmp.eq.s32.totalorder %s20, 1
      %p90 = por %p88, %p89
      %p91 = scmp.ne.s32.totalorder %s80, %s81
      %p92 = scmp.eq.s32.totalorder %s20, 0
      %p93 = por %p91, %p92
      %p94 = scmp.ne.s32.totalorder %s80, %s81
      %p95 = scmp.eq.s32.totalorder %s21, 1
      %p96 = por %p94, %p95
      %p98 = scmp.ne.s32.totalorder %s81, %s97
      %p99 = scmp.eq.s32.totalorder %s21, 0
      %p100 = por %p98, %p99
      %s101 = ssub.s32 %s15, %s22
      %p102 = scmp.eq.s32.totalorder %s101, 0
      %s104 = sadd.s32 %s103, 1
      %s105 = scalar_select %p102, %s103, %s104
      %p108 = pneg %p102
      %p109 = scmp.eq.s32.totalorder %s15, 1
      %p110 = por %p108, %p109
      %p111 = scmp.ne.s32.totalorder %s103, %s106
      %p112 = scmp.eq.s32.totalorder %s15, 0
      %p113 = por %p111, %p112
      %p114 = scmp.ne.s32.totalorder %s103, %s106
      %p115 = scmp.eq.s32.totalorder %s20, 1
      %p116 = por %p114, %p115
      %p117 = scmp.ne.s32.totalorder %s106, %s107
      %p118 = scmp.eq.s32.totalorder %s20, 0
      %p119 = por %p117, %p118
      %p120 = scmp.ne.s32.totalorder %s106, %s107
      %p121 = scmp.eq.s32.totalorder %s21, 1
      %p122 = por %p120, %p121
      %p124 = scmp.ne.s32.totalorder %s107, %s123
      %p125 = scmp.eq.s32.totalorder %s21, 0
      %p126 = por %p124, %p125
      %p127 = scmp.le.s32.totalorder 1, %s15
      %p128 = scmp.lt.s32.totalorder %s15, 3
      %p129 = pnand %p127, %p128
      %p130 = pneg %p129
      // Predicated region
      $region9: #{tpu_custom_call.1} parent=5 // pred_check
        _
      $region10: #{tpu_custom_call.1} parent=5 // pred_check_branch
        %132 = sbr.rel (%p129) target = $region12
      $region11: #{tpu_custom_call.1} parent=5 // pred_region
        %s133 = ssub.s32 %s15, 1
      $region12: #{tpu_custom_call.1} parent=5 // pred_fallthru
        _
      %p134 = scmp.lt.s32.totalorder %s15, 2
      // Predicated region
      $region13: #{tpu_custom_call.1} parent=5 // pred_check
        %p135 = pneg %p134
      $region14: #{tpu_custom_call.1} parent=5 // pred_check_branch
        %137 = sbr.rel (%p135) target = $region16
      $region15: #{tpu_custom_call.1} parent=5 // pred_region
        // Predicated region
        $region17: #{tpu_custom_call.1} parent=15 // pred_check
          %p138 = pneg %p35
        $region18: #{tpu_custom_call.1} parent=15 // pred_check_branch
          %140 = sbr.rel (%p138) target = $region20
        $region19: #{tpu_custom_call.1} parent=15 // pred_region
          %p141 = scmp.lt.s32.totalorder %s15, 1
          %s142 = scalar_select %p141, %s15, 1
          %s143 = smul.addr %s142, 8
          %s144 = scalar_lea.vmem %s0, %s143
        $region20: #{tpu_custom_call.1} parent=15 // pred_fallthru
          _
        // Predicated region
        $region21: #{tpu_custom_call.1} parent=15 // pred_check
          %p145 = pneg %p61
        $region22: #{tpu_custom_call.1} parent=15 // pred_check_branch
          %147 = sbr.rel (%p145) target = $region24
        $region23: #{tpu_custom_call.1} parent=15 // pred_region
          %s148 = sand.u32 %s51, 1
          %s149 = scalar_lea.sflag [#allocation3], %s148
          %s150 = sand.u32 %s51, 1
          %s151 = smul.addr %s150, 8
          %s152 = scalar_lea.vmem [#allocation2], %s151
          %154 = vsyncadd %s149, 0
          %s155 = smul.addr %s15, 8
          %s156 = scalar_lea.hbm %s1, %s155
          %s158 = sshll.u32 %s156, 4
          %s159 = int_to_ptr.hbm [resolvable:$true] %s158
          %s160 = sshll.u32 %s152, 4
          %s161 = int_to_ptr.vmem [resolvable:$true] %s160
          %163 = dma.hbm_to_vmem [thread:$0]  %s159, 128, %s161, %s149
        $region24: #{tpu_custom_call.1} parent=15 // pred_fallthru
          _
        // Predicated region
        $region25: #{tpu_custom_call.1} parent=15 // pred_check
          %p164 = pneg %p87
        $region26: #{tpu_custom_call.1} parent=15 // pred_check_branch
          %166 = sbr.rel (%p164) target = $region28
        $region27: #{tpu_custom_call.1} parent=15 // pred_region
          %p167 = scmp.lt.s32.totalorder %s15, 1
          %s168 = scalar_select %p167, %s15, 1
          %s169 = smul.addr %s168, 8
          %s170 = scalar_lea.vmem %s2, %s169
        $region28: #{tpu_custom_call.1} parent=15 // pred_fallthru
          _
      $region16: #{tpu_custom_call.1} parent=5 // pred_fallthru
        _
      %p171 = scmp.le.s32.totalorder 1, %s15
      %p172 = scmp.lt.s32.totalorder %s15, 3
      %p173 = pnand %p171, %p172
      %p174 = pneg %p173
      // Predicated region
      $region29: #{tpu_custom_call.1} parent=5 // pred_check
        _
      $region30: #{tpu_custom_call.1} parent=5 // pred_check_branch
        %176 = sbr.rel (%p173) target = $region32
      $region31: #{tpu_custom_call.1} parent=5 // pred_region
        %s177 = ssub.s32 %s15, 1
        %s178 = sand.u32 %s54, 1
        %s179 = scalar_lea.sflag [#allocation3], %s178
        %s180 = sand.u32 %s54, 1
        %s181 = smul.addr %s180, 8
        %s182 = scalar_lea.vmem [#allocation2], %s181
        // Predicated region
        $region33: #{tpu_custom_call.1} parent=31 // pred_check
          %p183 = pneg %p67
        $region34: #{tpu_custom_call.1} parent=31 // pred_check_branch
          %185 = sbr.rel (%p183) target = $region36
        $region35: #{tpu_custom_call.1} parent=31 // pred_region
          %187 = dma.done %s179, 128
        $region36: #{tpu_custom_call.1} parent=31 // pred_fallthru
          _
        %p188 = scmp.lt.s32.totalorder %s20, 1
        %s189 = scalar_select %p188, %s20, 1
        %s190 = smul.addr %s189, 8
        %s191 = scalar_lea.vmem %s0, %s190
        %p192 = pneg %p41
        %p193 = pneg %p38
        %s194 = sand.u32 %s54, 1
        %s195 = scalar_lea.sflag [#allocation3], %s194
        %s196 = sand.u32 %s54, 1
        %s197 = smul.addr %s196, 8
        %s198 = scalar_lea.vmem [#allocation2], %s197
        %p199 = pneg %p67
        %p200 = pneg %p64
        %p201 = scmp.lt.s32.totalorder %s20, 1
        %s202 = scalar_select %p201, %s20, 1
        %s203 = smul.addr %s202, 8
        %s204 = scalar_lea.vmem %s2, %s203
        %p205 = pneg %p93
        %p206 = pneg %p90
        %p207 = pneg %p119
        %p208 = pneg %p116
        %s209 = sand.u32 %s106, 1
        %s210 = scalar_lea.sflag [#allocation4], %s209
        %s211 = sand.u32 %s106, 1
        %s212 = smul.addr %s211, 8
        %s213 = scalar_lea.vmem [#allocation5], %s212
        %p214 = scmp.lt.s32.totalorder %s20, 1
        %s215 = scalar_select %p214, %s20, 1
        %s216 = smul.addr %s215, 8
        %s217 = scalar_lea.vmem %s0, %s216
        %p218 = scmp.lt.s32.totalorder %s20, 1
        %s219 = scalar_select %p218, %s20, 1
        %s220 = smul.addr %s219, 8
        %s221 = scalar_lea.vmem %s2, %s220
        %v222 = vld [vmem:[%s217] sm:$0xff]
        %v223 = vld [vmem:[%s182] sm:$0xff]
        %v224 = vsub.f32 %v222, %v223
        %v225 = vand.u32 2147483647, %v224
        %v226 = vld [vmem:[%s221] sm:$0xff]
        %228 = vset.pattern.permute.xlu0 0
        %229 = vperm.xlu0 %228, %v226
        %v230 = vpop.permute.xlu0 %229
        %v232 = vmul.f32 %v225, %v230
        %vm233 = vcmask 261120
        %v234 = vsel %vm233, %v232, 0.0
        %235 = vadd.xlane.f32.xlu0 %v234
        %v236 = vpop.xlane.xlu0 %235
        %v237 = vrot.slane %v236, 4
        %v238 = vadd.f32 %v236, %v237
        %v239 = vrot.slane %v238, 2
        %v240 = vadd.f32 %v238, %v239
        %v241 = vrot.slane %v240, 1
        %v242 = vadd.f32 %v240, %v241
        %s243 = vtos %v242
        %v244 = vstv %s243
        %245 = vst [vmem:[%s213] sm:$0xff] %v244
        %s246 = sand.u32 %s106, 1
        %s247 = scalar_lea.sflag [#allocation4], %s246
        %s248 = sand.u32 %s106, 1
        %s249 = smul.addr %s248, 8
        %s250 = scalar_lea.vmem [#allocation5], %s249
        // Predicated region
        $region37: #{tpu_custom_call.1} parent=31 // pred_check
          %p251 = pneg %p116
        $region38: #{tpu_custom_call.1} parent=31 // pred_check_branch
          %253 = sbr.rel (%p251) target = $region40
        $region39: #{tpu_custom_call.1} parent=31 // pred_region
          %255 = vsyncadd %s247, 0
          %s256 = smul.addr %s20, 8
          %s257 = scalar_lea.hbm %s3, %s256
          %s259 = sshll.u32 %s250, 4
          %s260 = int_to_ptr.vmem [resolvable:$true] %s259
          %s261 = sshll.u32 %s257, 4
          %s262 = int_to_ptr.hbm [resolvable:$true] %s261
          %264 = dma.vmem_to_hbm [thread:$0]  %s260, 128, %s262, %s247
        $region40: #{tpu_custom_call.1} parent=31 // pred_fallthru
          _
      $region32: #{tpu_custom_call.1} parent=5 // pred_fallthru
        _
      %p265 = scmp.le.s32.totalorder 2, %s15
      // Predicated region
      $region41: #{tpu_custom_call.1} parent=5 // pred_check
        %p266 = pneg %p265
      $region42: #{tpu_custom_call.1} parent=5 // pred_check_branch
        %268 = sbr.rel (%p266) target = $region44
      $region43: #{tpu_custom_call.1} parent=5 // pred_region
        %s269 = ssub.s32 %s15, 2
        // Predicated region
        $region45: #{tpu_custom_call.1} parent=43 // pred_check
          %p270 = pneg %p122
        $region46: #{tpu_custom_call.1} parent=43 // pred_check_branch
          %272 = sbr.rel (%p270) target = $region48
        $region47: #{tpu_custom_call.1} parent=43 // pred_region
          %s273 = sand.u32 %s107, 1
          %s274 = scalar_lea.sflag [#allocation4], %s273
          %s275 = sand.u32 %s107, 1
          %s276 = smul.addr %s275, 8
          %s277 = scalar_lea.vmem [#allocation5], %s276
          %279 = dma.done %s274, 128
        $region48: #{tpu_custom_call.1} parent=43 // pred_fallthru
          _
      $region44: #{tpu_custom_call.1} parent=5 // pred_fallthru
        _
    $region6: #{tpu_custom_call.1} parent=1 // loop_footer
      %s19 = sadd.s32 1, %s15
    $region7: #{tpu_custom_call.1} parent=1 // loop_footer_branch
      %14 = sbr.rel target = $region3
    $region8: #{tpu_custom_call.1} parent=1 // loop_exit
      _
    %280 = vsyncpa [#allocation3], 1
    %s281 = scalar_lea.sflag [#allocation3], 1
    %282 = vsyncpa %s281, 1
    %283 = vsyncpa [#allocation4], 1
    %s284 = scalar_lea.sflag [#allocation4], 1
    %285 = vsyncpa %s284, 1

</llo_original>
